<compile_context>
chip_gen: v7x
topology: tpu7x:2x2x1
jax: 0.10.0
libtpu: 0.0.40
codegen_flags: <defaults>
</compile_context>

<pallas_src>
import jax
import jax.numpy as jnp
from jax.experimental import pallas as pl
from jax.experimental.pallas import tpu as pltpu

LANES = 128
SUBLANES = 8
CHUNK_ROWS = 512                  # inner accumulation chunk (~256 KiB f32 temps)
TARGET_BLOCK_BYTES = 2 << 20      # ~2 MiB per input block


def _make_kernel(rows, row_tile, chunk_rows, tiles_total, tiles_per_split,
                 need_mask, has_overhang):
    n_full = row_tile // chunk_rows
    rem_rows = row_tile - n_full * chunk_rows     # multiple of 8 (possibly 0)
    last = tiles_total - 1

    def kernel(x_ref, y_ref, o_ref):
        c = pl.program_id(0)          # core-split axis ("parallel")
        i = pl.program_id(1)          # reduction axis   ("arbitrary")
        gtile = c * tiles_per_split + i

        @pl.when(i == 0)
        def _():
            o_ref[...] = jnp.zeros_like(o_ref)

        def chunk_sumsq(r0, cr, masked, block_row0):
            d = (x_ref[pl.ds(r0, cr), :].astype(jnp.float32)
                 - y_ref[pl.ds(r0, cr), :].astype(jnp.float32))
            sq = d * d
            if masked:
                # Ragged last tile: zero rows whose global index is >= rows.
                row_ids = jax.lax.broadcasted_iota(jnp.int32, (cr, LANES), 0)
                sq = jnp.where(row_ids + r0 < rows - block_row0, sq, 0.0)
            # Fold (cr,128) -> (8,128) with pure VPU adds; the one cross-lane
            # reduce happens once, outside the kernel.
            return jnp.sum(sq.reshape(cr // SUBLANES, SUBLANES, LANES), axis=0)

        def tile_sumsq(masked):
            block_row0 = gtile * row_tile
            acc = jnp.zeros((SUBLANES, LANES), jnp.float32)
            if n_full > 0:
                def body(j, a):
                    r0 = pl.multiple_of(j * chunk_rows, SUBLANES)
                    return a + chunk_sumsq(r0, chunk_rows, masked, block_row0)
                acc = jax.lax.fori_loop(0, n_full, body, acc, unroll=True)
            if rem_rows > 0:
                acc = acc + chunk_sumsq(n_full * chunk_rows, rem_rows,
                                        masked, block_row0)
            o_ref[0] += acc

        if need_mask:
            # Only the single globally-last tile pays for the mask.
            @pl.when(gtile < last)
            def _():
                tile_sumsq(False)

            @pl.when(gtile == last)
            def _():
                tile_sumsq(True)
        elif has_overhang:
            # Skip the overhang grid cell of the 2-way core split.
            @pl.when(gtile <= last)
            def _():
                tile_sumsq(False)
        else:
            tile_sumsq(False)

    return kernel


def _sumsq_pallas(x2d, y2d):
    """Sum of squared differences of two (rows, 128) slabs (rows % 8 == 0)."""
    rows = x2d.shape[0]
    itemsize = jnp.dtype(x2d.dtype).itemsize

    # Rows per block: ~TARGET_BLOCK_BYTES per input, rounded to a CHUNK_ROWS
    # multiple so the in-kernel chunk loop divides evenly; never larger than
    # the array, so no block ever exceeds the array bounds.
    cap_rows = max(CHUNK_ROWS,
                   (TARGET_BLOCK_BYTES // (LANES * itemsize))
                   // CHUNK_ROWS * CHUNK_ROWS)
    row_tile = rows if rows <= cap_rows else cap_rows
    tiles_total = pl.cdiv(rows, row_tile)
    need_mask = (rows % row_tile) != 0
    chunk_rows = min(CHUNK_ROWS, row_tile)

    # 2-way split across TensorCores (v7x megacore); odd tile counts still
    # split -- the overhang cell is clamped in the index_map and skipped
    # in-kernel. v5e/v6e (1 TC) just iterate both splits sequentially.
    nsplit = 2 if tiles_total >= 2 else 1
    tiles_per_split = pl.cdiv(tiles_total, nsplit)
    has_overhang = nsplit * tiles_per_split > tiles_total

    kernel = _make_kernel(rows, row_tile, chunk_rows, tiles_total,
                          tiles_per_split, need_mask, has_overhang)

    if has_overhang:
        def in_idx(c, i):
            return (jnp.minimum(c * tiles_per_split + i, tiles_total - 1), 0)
    else:
        def in_idx(c, i):
            return (c * tiles_per_split + i, 0)

    block_bytes = row_tile * LANES * itemsize
    # 2 inputs x 2 pipeline buffers x block + headroom for chunk temporaries.
    vmem_limit = int(min(48 << 20, 4 * block_bytes + (8 << 20)))

    partial = pl.pallas_call(
        kernel,
        out_shape=jax.ShapeDtypeStruct((nsplit, SUBLANES, LANES), jnp.float32),
        grid_spec=pltpu.PrefetchScalarGridSpec(
            num_scalar_prefetch=0,
            grid=(nsplit, tiles_per_split),
            in_specs=[
                pl.BlockSpec((row_tile, LANES), in_idx),
                pl.BlockSpec((row_tile, LANES), in_idx),
            ],
            out_specs=pl.BlockSpec((1, SUBLANES, LANES), lambda c, i: (c, 0, 0)),
        ),
        compiler_params=pltpu.CompilerParams(
            dimension_semantics=("parallel", "arbitrary"),
            vmem_limit_bytes=vmem_limit,
        ),
    )(x2d, y2d)

    # Final cross-core / cross-lane reduce is tiny; do it in plain JAX.
    return jnp.sum(partial)


def group_l2_loss(inputs, labels):
    """Pallas equivalent of torch.norm(inputs - labels, p=2) -> scalar."""
    assert inputs.shape == labels.shape
    x = jnp.ravel(inputs)
    y = jnp.ravel(labels)
    n = x.shape[0]

    # Kernel streams the largest prefix that is a multiple of 8*128 = 1024
    # elements (every block is a sublane-aligned, lane-dense 2-D slab); the
    # <=1023-element tail is summed in a tiny JAX epilogue.  No jnp.pad of the
    # full operands.
    n_k = (n // (SUBLANES * LANES)) * (SUBLANES * LANES)

    total = jnp.zeros((), jnp.float32)
    if n_k < n:
        # TODO(synk): a manual-DMA (memory_space=pl.ANY) path would also avoid
        # the prefix-slice copy XLA emits when n is not 1024-aligned.
        dt = x[n_k:].astype(jnp.float32) - y[n_k:].astype(jnp.float32)
        total = total + jnp.sum(dt * dt)
    if n_k > 0:
        xk = x if n_k == n else x[:n_k]
        yk = y if n_k == n else y[:n_k]
        total = total + _sumsq_pallas(xk.reshape(n_k // LANES, LANES),
                                      yk.reshape(n_k // LANES, LANES))

    return jnp.sqrt(total).astype(inputs.dtype)


if __name__ == "__main__":
    key = jax.random.PRNGKey(0)
    k1, k2 = jax.random.split(key)
    inputs = jax.random.normal(k1, (2, 4, 16, 16), dtype=jnp.float32)
    labels = jax.random.normal(k2, (2, 4, 16, 16), dtype=jnp.float32)

    loss = group_l2_loss(inputs, labels)
    jax.block_until_ready(loss)

    ref = jnp.sqrt(jnp.sum((inputs - labels) ** 2))
    assert jnp.allclose(loss, ref, rtol=1e-5, atol=1e-5), (loss, ref)
    print("KERNEL_OK")
</pallas_src>

<mosaic_0001>
module attributes {stable_mosaic.version = 11 : i64} {
  func.func @kernel(%arg0: i32, %arg1: i32, %arg2: memref<16x128xf32, #tpu.memory_space<vmem>>, %arg3: memref<16x128xf32, #tpu.memory_space<vmem>>, %arg4: memref<1x8x128xf32, #tpu.memory_space<vmem>>) attributes {dimension_semantics = [#tpu.dimension_semantics<parallel>, #tpu.dimension_semantics<arbitrary>], iteration_bounds = array<i64: 1, 1>, scalar_prefetch = 0 : i64, scratch_operands = 0 : i64, tpu.core_type = #tpu.core_type<tc>, window_params = [{transform_indices = @transform_0, window_bounds = array<i64: 16, 128>}, {transform_indices = @transform_1, window_bounds = array<i64: 16, 128>}, {transform_indices = @transform_2, window_bounds = array<i64: 1, 8, 128>}]} {
    %c0_i32 = arith.constant 0 : i32
    %0 = arith.cmpi eq, %arg1, %c0_i32 : i32
    %1 = arith.extui %0 : i1 to i32
    %c0_i32_0 = arith.constant 0 : i32
    %2 = arith.cmpi ne, %1, %c0_i32_0 : i32
    scf.if %2 {
      %cst_10 = arith.constant 0.000000e+00 : f32
      %21 = vector.broadcast %cst_10 : f32 to vector<1x8x128xf32>
      %c0_11 = arith.constant 0 : index
      %c0_12 = arith.constant 0 : index
      %c0_13 = arith.constant 0 : index
      %22 = vector.load %arg4[%c0_11, %c0_12, %c0_13] : memref<1x8x128xf32, #tpu.memory_space<vmem>>, vector<1x8x128xf32>
      tpu.vector_store %arg4[%c0_11, %c0_12, %c0_13], %21 {strides = array<i32>} : memref<1x8x128xf32, #tpu.memory_space<vmem>>, vector<1x8x128xf32>,
    } else {
    }
    %cst = arith.constant 0.000000e+00 : f32
    %3 = vector.broadcast %cst : f32 to vector<8x128xf32>
    %c0_i32_1 = arith.constant 0 : i32
    %c16_i32 = arith.constant 16 : i32
    %4 = arith.muli %c0_i32_1, %c16_i32 : i32
    %5 = tpu.assume_multiple %4, 8 : i32
    %6 = arith.index_cast %5 : i32 to index
    %c0 = arith.constant 0 : index
    %7 = vector.load %arg2[%6, %c0] : memref<16x128xf32, #tpu.memory_space<vmem>>, vector<16x128xf32>
    %8 = arith.index_cast %5 : i32 to index
    %c0_2 = arith.constant 0 : index
    %9 = vector.load %arg3[%8, %c0_2] : memref<16x128xf32, #tpu.memory_space<vmem>>, vector<16x128xf32>
    %10 = arith.subf %7, %9 : vector<16x128xf32>
    %11 = arith.mulf %10, %10 : vector<16x128xf32>
    %12 = vector.shape_cast %11 : vector<16x128xf32> to vector<2x8x128xf32>
    %cst_3 = arith.constant dense<0.000000e+00> : vector<8x128xf32>
    %13 = vector.multi_reduction <add>, %12, %cst_3 [0] : vector<2x8x128xf32> to vector<8x128xf32>
    %14 = arith.addf %3, %13 : vector<8x128xf32>
    %c1_i32 = arith.constant 1 : i32
    %c0_4 = arith.constant 0 : index
    %c0_5 = arith.constant 0 : index
    %c0_6 = arith.constant 0 : index
    %15 = vector.load %arg4[%c0_4, %c0_5, %c0_6] : memref<1x8x128xf32, #tpu.memory_space<vmem>>, vector<1x8x128xf32>
    %16 = vector.shape_cast %15 : vector<1x8x128xf32> to vector<8x128xf32>
    %17 = arith.addf %16, %14 : vector<8x128xf32>
    %c0_7 = arith.constant 0 : index
    %c0_8 = arith.constant 0 : index
    %c0_9 = arith.constant 0 : index
    %18 = vector.load %arg4[%c0_7, %c0_8, %c0_9] : memref<1x8x128xf32, #tpu.memory_space<vmem>>, vector<1x8x128xf32>
    %19 = vector.shape_cast %18 : vector<1x8x128xf32> to vector<8x128xf32>
    %20 = vector.shape_cast %17 : vector<8x128xf32> to vector<1x8x128xf32>
    tpu.vector_store %arg4[%c0_7, %c0_8, %c0_9], %20 {strides = array<i32>} : memref<1x8x128xf32, #tpu.memory_space<vmem>>, vector<1x8x128xf32>,
    return
  }
  func.func @transform_0(%arg0: i32, %arg1: i32) -> (i32, i32) {
    %c1_i32 = arith.constant 1 : i32
    %0 = arith.muli %arg0, %c1_i32 : i32
    %1 = arith.addi %0, %arg1 : i32
    %c0_i32 = arith.constant 0 : i32
    %c0_i32_0 = arith.constant 0 : i32
    return %1, %c0_i32 : i32, i32
  }
  func.func @transform_1(%arg0: i32, %arg1: i32) -> (i32, i32) {
    %c1_i32 = arith.constant 1 : i32
    %0 = arith.muli %arg0, %c1_i32 : i32
    %1 = arith.addi %0, %arg1 : i32
    %c0_i32 = arith.constant 0 : i32
    %c0_i32_0 = arith.constant 0 : i32
    return %1, %c0_i32 : i32, i32
  }
  func.func @transform_2(%arg0: i32, %arg1: i32) -> (i32, i32, i32) {
    %c0_i32 = arith.constant 0 : i32
    %c0_i32_0 = arith.constant 0 : i32
    %c0_i32_1 = arith.constant 0 : i32
    return %arg0, %c0_i32, %c0_i32_0 : i32, i32, i32
  }
}

</mosaic_0001>

<llo_original>
// kernel: tpu_custom_call.1
$region0: #{tpu_custom_call.1}
  #allocation0 [shape = 'u32[]', space=smem, size = 0x4, offset = 0x4, fixed_abs, tag = 'smem constant byte address 0x4 - core index']
  #allocation1 [shape = 'u32[144,128]{1,0:T(1,128)}', space=vmem, size = 0x12000, scoped, tag = 'internal scratch']
  %s0 = inlined_call_operand.hbm [shape: f32[16,128], index: 0, kind: input, shape index: {}]
  %s1 = inlined_call_operand.hbm [shape: f32[16,128], index: 1, kind: input, shape index: {}]
  %s2 = inlined_call_operand.hbm [shape: f32[1,8,128], index: 2, kind: output, shape index: {}]
  %s3 = sld [smem:[#allocation0]]
  $region30: #{tpu_custom_call.1} parent=0
    _
  %s5 = ssub.s32 1, %s3
  %s6 = scalar_select 0, %s5, %s3
  $region1: #{tpu_custom_call.1} parent=0
    #allocation2 [shape = 'u8[8192]{0}', space=vmem, size = 0x2000, scoped, tag = 'input window, operand 0, single buffered']
    #allocation3 [shape = 's32[1]{0}', space=sflag, size = 0x4, scoped, tag = 'scoped memory for tpu_custom_call.1']
    #allocation4 [shape = 's32[1]{0}', space=sflag, size = 0x4, scoped, tag = 'scoped memory for tpu_custom_call.1']
    #allocation5 [shape = 'u8[8192]{0}', space=vmem, size = 0x2000, scoped, tag = 'input window, operand 1, single buffered']
    #allocation6 [shape = 's32[1]{0}', space=sflag, size = 0x4, scoped, tag = 'scoped memory for tpu_custom_call.1']
    #allocation7 [shape = 'u8[4096]{0}', space=vmem, size = 0x1000, scoped, tag = 'output window, operand 0, single buffered']
    %7 = vsyncpa [#allocation3], 0
    %8 = vsyncpa [#allocation6], 0
    %9 = vsyncpa [#allocation4], 0
    // Predicated region
    $region2: #{tpu_custom_call.1} parent=1 // pred_check
      _
    $region3: #{tpu_custom_call.1} parent=1 // pred_check_branch
      %11 = sbr.rel (0) target = $region5
    $region4: #{tpu_custom_call.1} parent=1 // pred_region
      %s12 = sadd.s32 0, 0
      %s13 = smul.u32 2, %s12
      %s15 = ssub.s32 256, 256
      %16 = vsyncadd [#allocation3], %s15
      %s17 = smul.addr %s13, 128
      %s18 = scalar_lea.hbm %s0, %s17
      %s19 = sshll.u32 [#allocation2], 4
      %s20 = int_to_ptr.vmem [resolvable:$true] %s19
      %25 = dma.hbm_to_vmem [thread:$0]  %s18, 256, %s20, [#allocation3], 128, 128, 8
    $region5: #{tpu_custom_call.1} parent=1 // pred_fallthru
      _
    // Predicated region
    $region6: #{tpu_custom_call.1} parent=1 // pred_check
      _
    $region7: #{tpu_custom_call.1} parent=1 // pred_check_branch
      %27 = sbr.rel (0) target = $region9
    $region8: #{tpu_custom_call.1} parent=1 // pred_region
      %s28 = sadd.s32 0, 0
      %s29 = smul.u32 2, %s28
      %s31 = ssub.s32 256, 256
      %32 = vsyncadd [#allocation6], %s31
      %s33 = smul.addr %s29, 128
      %s34 = scalar_lea.hbm %s1, %s33
      %s35 = sshll.u32 [#allocation5], 4
      %s36 = int_to_ptr.vmem [resolvable:$true] %s35
      %41 = dma.hbm_to_vmem [thread:$0]  %s34, 256, %s36, [#allocation6], 128, 128, 8
    $region9: #{tpu_custom_call.1} parent=1 // pred_fallthru
      _
    // Predicated region
    $region10: #{tpu_custom_call.1} parent=1 // pred_check
      _
    $region11: #{tpu_custom_call.1} parent=1 // pred_check_branch
      %43 = sbr.rel (0) target = $region13
    $region12: #{tpu_custom_call.1} parent=1 // pred_region
      %44 = dma.done [#allocation3], 256
    $region13: #{tpu_custom_call.1} parent=1 // pred_fallthru
      _
    // Predicated region
    $region14: #{tpu_custom_call.1} parent=1 // pred_check
      _
    $region15: #{tpu_custom_call.1} parent=1 // pred_check_branch
      %46 = sbr.rel (0) target = $region17
    $region16: #{tpu_custom_call.1} parent=1 // pred_region
      %47 = dma.done [#allocation6], 256
    $region17: #{tpu_custom_call.1} parent=1 // pred_fallthru
      _
    %s48 = sadd.s32 0, 0
    %s49 = smul.u32 2, %s48
    %s50 = sadd.s32 0, 0
    %s51 = smul.u32 2, %s50
    %p52 = scmp.eq.s32.totalorder 0, 0
    // Predicated region
    $region18: #{tpu_custom_call.1} parent=1 // pred_check
      %p53 = pneg %p52
    $region19: #{tpu_custom_call.1} parent=1 // pred_check_branch
      %55 = sbr.rel (%p53) target = $region21
    $region20: #{tpu_custom_call.1} parent=1 // pred_region
      %56 = vst [vmem:[#allocation7] sm:$0xff] 0.0
    $region21: #{tpu_custom_call.1} parent=1 // pred_fallthru
      _
    %v57 = vld [vmem:[#allocation2] sm:$0xff]
    %v58 = vld [vmem:[#allocation2 + $0x8] sm:$0xff]
    %v59 = vld [vmem:[#allocation5] sm:$0xff]
    %v60 = vld [vmem:[#allocation5 + $0x8] sm:$0xff]
    %v61 = vsub.f32 %v57, %v59
    %v62 = vsub.f32 %v58, %v60
    %v63 = vmul.f32 %v61, %v61
    %v64 = vmul.f32 %v62, %v62
    %v65 = vadd.f32 %v63, %v64
    %v66 = vadd.f32 %v65, 0.0
    %v67 = vld [vmem:[#allocation7] sm:$0xff]
    %v68 = vadd.f32 %v67, %v66
    %69 = vst [vmem:[#allocation7] sm:$0xff] %v68
    // Predicated region
    $region22: #{tpu_custom_call.1} parent=1 // pred_check
      _
    $region23: #{tpu_custom_call.1} parent=1 // pred_check_branch
      %71 = sbr.rel (0) target = $region25
    $region24: #{tpu_custom_call.1} parent=1 // pred_region
      %s73 = ssub.s32 128, 128
      %74 = vsyncadd [#allocation4], %s73
      %s76 = sshll.u32 [#allocation7], 4
      %s77 = int_to_ptr.vmem [resolvable:$true] %s76
      %79 = dma.vmem_to_hbm [thread:$0]  %s77, 128, %s2, [#allocation4]
    $region25: #{tpu_custom_call.1} parent=1 // pred_fallthru
      _
    // Predicated region
    $region26: #{tpu_custom_call.1} parent=1 // pred_check
      _
    $region27: #{tpu_custom_call.1} parent=1 // pred_check_branch
      %81 = sbr.rel (0) target = $region29
    $region28: #{tpu_custom_call.1} parent=1 // pred_region
      %82 = dma.done [#allocation4], 128
    $region29: #{tpu_custom_call.1} parent=1 // pred_fallthru
      _
    %83 = vsyncpa [#allocation3], 1
    %84 = vsyncpa [#allocation6], 1
    %85 = vsyncpa [#allocation4], 1

</llo_original>
